<compile_context>
chip_gen: v5e
topology: v5e:2x2
jax: 0.10.0
libtpu: 0.0.40
codegen_flags: <defaults>
</compile_context>

<pallas_src>
import jax
import jax.numpy as jnp
from jax.experimental import pallas as pl
from jax.experimental.pallas import tpu as pltpu


def _round_up(x, m):
    return ((x + m - 1) // m) * m


def _patch_embed_kernel(p_ref, w_ref, b_ref, o_ref):
    # p_ref: (tm, K)  w_ref: (K, Dp)  b_ref: (1, Dp) f32  o_ref: (tm, Dp)
    acc = jnp.dot(p_ref[...], w_ref[...], preferred_element_type=jnp.float32)
    o_ref[...] = (acc + b_ref[...]).astype(o_ref.dtype)


def patch_embed(x, weight, bias, patch_size, *, compute_dtype=jnp.bfloat16,
                out_dtype=None, tm=512):
    """x: [B, C, H, W] (NCHW, like PyTorch). weight: [D, C, ph, pw]. bias: [D].
    Returns [B, N, D] with N = (H//ph)*(W//pw)."""
    B, C, H, W = x.shape
    D = weight.shape[0]
    ph, pw = patch_size
    assert H % ph == 0 and W % pw == 0
    Hp, Wp = H // ph, W // pw
    N = Hp * Wp
    K = C * ph * pw
    M = B * N
    out_dtype = x.dtype if out_dtype is None else out_dtype

    in_isz = jnp.dtype(compute_dtype).itemsize
    out_isz = jnp.dtype(out_dtype).itemsize

    # ---- tile sizes -----------------------------------------------------------
    Dp = _round_up(D, 128)                  # lane-dense output (unmasked vst)
    row_align = 16 if in_isz < 4 else 8     # bf16 packs two rows per sublane
    Mp = _round_up(M, row_align)            # tiny (<= row_align-1 rows) pad only if unaligned
    if Mp <= tm:
        # Small problems: aim for >= 2 grid steps so both v7x TensorCores get work.
        tm_eff = max(row_align, _round_up(pl.cdiv(Mp, 2), row_align))
    else:
        tm_eff = _round_up(tm, row_align)   # default 512: multiple of 256 (v6e/v7x MXU)
    grid = (pl.cdiv(Mp, tm_eff),)           # ragged last block is masked by Pallas

    # ---- glue: patch matrix, weight matrix, bias ------------------------------
    # [B, C, Hp, ph, Wp, pw] -> [B, Hp, Wp, C, ph, pw] -> [B*N, K]; no K padding.
    patches = x.reshape(B, C, Hp, ph, Wp, pw)
    patches = jnp.transpose(patches, (0, 2, 4, 1, 3, 5)).reshape(M, K)
    patches = patches.astype(compute_dtype)
    if Mp != M:
        patches = jnp.pad(patches, ((0, Mp - M), (0, 0)))

    # Conv weight [D, C, ph, pw] -> [K, D] (same (C, ph, pw) flatten order);
    # pad only the output (lane) dim.
    w_mat = weight.reshape(D, K).T.astype(compute_dtype)
    w_mat = jnp.pad(w_mat, ((0, 0), (0, Dp - D)))
    b_mat = jnp.pad(bias.astype(jnp.float32), (0, Dp - D)).reshape(1, Dp)

    # Grid-invariant weight: single-buffer it when large so it doesn't compete
    # with the row-tile double buffers (matters on v7x's 64 MiB VMEM).
    w_bytes = K * Dp * in_isz
    if w_bytes >= (8 << 20):
        w_spec = pl.BlockSpec((K, Dp), lambda i: (0, 0), pipeline_mode=pl.Buffered(1))
        w_bufs = 1
    else:
        w_spec = pl.BlockSpec((K, Dp), lambda i: (0, 0))
        w_bufs = 2

    # ---- VMEM budget (generation-aware ceiling) --------------------------------
    est = (2 * tm_eff * K * in_isz          # patch tiles (double-buffered)
           + w_bufs * w_bytes               # weight
           + 2 * Dp * 4                     # bias
           + 2 * tm_eff * Dp * out_isz)     # output tiles
    try:
        phys_vmem = int(getattr(pltpu.get_tpu_info(), "vmem_capacity_bytes",
                                64 * 1024 * 1024))
    except Exception:
        phys_vmem = 64 * 1024 * 1024        # conservative: v7x per-TC size
    vmem_limit = int(min(max(2 * est, 32 * 1024 * 1024), (phys_vmem * 3) // 4))

    cost = pl.CostEstimate(
        flops=2 * Mp * K * Dp,
        transcendentals=0,
        bytes_accessed=Mp * K * in_isz + w_bytes + Dp * 4 + Mp * Dp * out_isz,
    )

    out_flat = pl.pallas_call(
        _patch_embed_kernel,
        out_shape=jax.ShapeDtypeStruct((Mp, Dp), out_dtype),
        grid_spec=pltpu.PrefetchScalarGridSpec(
            num_scalar_prefetch=0,
            grid=grid,
            in_specs=[
                pl.BlockSpec((tm_eff, K), lambda i: (i, 0)),
                w_spec,
                pl.BlockSpec((1, Dp), lambda i: (0, 0)),
            ],
            out_specs=pl.BlockSpec((tm_eff, Dp), lambda i: (i, 0)),
        ),
        compiler_params=pltpu.CompilerParams(
            dimension_semantics=("parallel",),
            vmem_limit_bytes=vmem_limit,
            # Hint: fuse the transpose/cast that builds `patches` into the
            # kernel's input DMA instead of round-tripping it through HBM.
            allow_input_fusion=[True, False, False],
        ),
        cost_estimate=cost,
    )(patches, w_mat, b_mat)

    out = out_flat
    if Mp != M or Dp != D:
        out = out[:M, :D]
    return out.reshape(B, N, D)


def _reference(x, weight, bias, patch_size):
    """Pure-JAX reference matching PyTorch Conv2d(stride=kernel) + flatten/transpose."""
    out = jax.lax.conv_general_dilated(
        x, weight,
        window_strides=patch_size,
        padding="VALID",
        dimension_numbers=("NCHW", "OIHW", "NCHW"),
    ) + bias.reshape(1, -1, 1, 1)
    B, D, Hp, Wp = out.shape
    return jnp.transpose(out.reshape(B, D, Hp * Wp), (0, 2, 1))


if __name__ == "__main__":
    # Small shapes consistent with the module: img_size=16, patch_size=4,
    # in_chans=4, embed_dim=32, batch=2  ->  num_patches = (16/4)*(16/4) = 16
    B, C, H, W = 2, 4, 16, 16
    patch = (4, 4)
    D = 32

    key = jax.random.PRNGKey(0)
    kx, kw, kb = jax.random.split(key, 3)
    x = jax.random.normal(kx, (B, C, H, W), dtype=jnp.float32)
    weight = jax.random.normal(kw, (D, C, patch[0], patch[1]), dtype=jnp.float32) * 0.02
    bias = jax.random.normal(kb, (D,), dtype=jnp.float32) * 0.02

    ref = _reference(x, weight, bias, patch)
    N = (H // patch[0]) * (W // patch[1])

    # Exact f32 compute path (tight tolerance).
    out_f32 = jax.block_until_ready(
        patch_embed(x, weight, bias, patch, compute_dtype=jnp.float32))
    assert out_f32.shape == (B, N, D), out_f32.shape
    assert jnp.allclose(out_f32, ref, atol=1e-4, rtol=1e-4), \
        float(jnp.abs(out_f32 - ref).max())

    # Production bf16 MXU path with bf16 output (halved writeback bytes).
    out_bf16 = jax.block_until_ready(
        patch_embed(x, weight, bias, patch, out_dtype=jnp.bfloat16))
    assert out_bf16.shape == (B, N, D), out_bf16.shape
    assert jnp.allclose(out_bf16.astype(jnp.float32), ref, atol=3e-2, rtol=3e-2), \
        float(jnp.abs(out_bf16.astype(jnp.float32) - ref).max())

    # Ragged-last-block validation (review ask): M=48 rows, tm=32 -> 2 grid
    # steps, last block only half-valid; checks Pallas write masking.
    x3 = jax.random.normal(jax.random.PRNGKey(1), (3, C, H, W), dtype=jnp.float32)
    ref3 = _reference(x3, weight, bias, patch)
    out3 = jax.block_until_ready(
        patch_embed(x3, weight, bias, patch, compute_dtype=jnp.float32, tm=32))
    assert out3.shape == (3, N, D), out3.shape
    assert jnp.allclose(out3, ref3, atol=1e-4, rtol=1e-4), \
        float(jnp.abs(out3 - ref3).max())

    print("KERNEL_OK")
</pallas_src>

<mosaic_0001>
module attributes {stable_mosaic.version = 11 : i64} {
  func.func @_patch_embed_kernel(%arg0: i32, %arg1: memref<16x64xf32, #tpu.memory_space<vmem>>, %arg2: memref<64x128xf32, #tpu.memory_space<vmem>>, %arg3: memref<1x128xf32, #tpu.memory_space<vmem>>, %arg4: memref<16x128xf32, #tpu.memory_space<vmem>>) attributes {dimension_semantics = [#tpu.dimension_semantics<parallel>], iteration_bounds = array<i64: 2>, scalar_prefetch = 0 : i64, scratch_operands = 0 : i64, tpu.core_type = #tpu.core_type<tc>, window_params = [{transform_indices = @transform_0, window_bounds = array<i64: 16, 64>}, {pipeline_mode = #tpu.pipeline_mode<synchronous>, transform_indices = @transform_1, window_bounds = array<i64: 64, 128>}, {pipeline_mode = #tpu.pipeline_mode<synchronous>, transform_indices = @transform_2, window_bounds = array<i64: 1, 128>}, {transform_indices = @transform_3, window_bounds = array<i64: 16, 128>}]} {
    %c0 = arith.constant 0 : index
    %c0_0 = arith.constant 0 : index
    %0 = vector.load %arg1[%c0, %c0_0] : memref<16x64xf32, #tpu.memory_space<vmem>>, vector<16x64xf32>
    %c0_1 = arith.constant 0 : index
    %c0_2 = arith.constant 0 : index
    %1 = vector.load %arg2[%c0_1, %c0_2] : memref<64x128xf32, #tpu.memory_space<vmem>>, vector<64x128xf32>
    %cst = arith.constant dense<0.000000e+00> : vector<16x128xf32>
    %2 = tpu.matmul %0, %1, %cst {dimension_numbers = #tpu.dot_dimension_numbers<[1], [0], [0], [1], [0, 0, 1, 1], [], []>} : vector<16x64xf32>, vector<64x128xf32>, vector<16x128xf32> -> vector<16x128xf32>
    %c0_3 = arith.constant 0 : index
    %c0_4 = arith.constant 0 : index
    %3 = vector.load %arg3[%c0_3, %c0_4] : memref<1x128xf32, #tpu.memory_space<vmem>>, vector<1x128xf32>
    %4 = vector.broadcast %3 : vector<1x128xf32> to vector<16x128xf32>
    %5 = arith.addf %2, %4 : vector<16x128xf32>
    %c0_5 = arith.constant 0 : index
    %c0_6 = arith.constant 0 : index
    %6 = vector.load %arg4[%c0_5, %c0_6] : memref<16x128xf32, #tpu.memory_space<vmem>>, vector<16x128xf32>
    tpu.vector_store %arg4[%c0_5, %c0_6], %5 {strides = array<i32>} : memref<16x128xf32, #tpu.memory_space<vmem>>, vector<16x128xf32>,
    return
  }
  func.func @transform_0(%arg0: i32) -> (i32, i32) {
    %c0_i32 = arith.constant 0 : i32
    %c0_i32_0 = arith.constant 0 : i32
    return %arg0, %c0_i32 : i32, i32
  }
  func.func @transform_1(%arg0: i32) -> (i32, i32) {
    %c0_i32 = arith.constant 0 : i32
    %c0_i32_0 = arith.constant 0 : i32
    %c0_i32_1 = arith.constant 0 : i32
    return %c0_i32, %c0_i32_0 : i32, i32
  }
  func.func @transform_2(%arg0: i32) -> (i32, i32) {
    %c0_i32 = arith.constant 0 : i32
    %c0_i32_0 = arith.constant 0 : i32
    %c0_i32_1 = arith.constant 0 : i32
    return %c0_i32, %c0_i32_0 : i32, i32
  }
  func.func @transform_3(%arg0: i32) -> (i32, i32) {
    %c0_i32 = arith.constant 0 : i32
    %c0_i32_0 = arith.constant 0 : i32
    return %arg0, %c0_i32 : i32, i32
  }
}

</mosaic_0001>

<llo_original>
// kernel: tpu_custom_call.1
$region0: #{tpu_custom_call.1}
  #allocation0 [shape = 'u32[]', space=smem, size = 0x4, offset = 0x4, fixed_abs, tag = 'smem constant byte address 0x4 - core index']
  #allocation1 [shape = 'u32[72,128]{1,0:T(1,128)}', space=vmem, size = 0x9000, scoped, tag = 'internal scratch']
  %s0 = inlined_call_operand.hbm [shape: f32[32,64], index: 0, kind: input, shape index: {}]
  %s1 = inlined_call_operand.hbm [shape: f32[64,128], index: 1, kind: input, shape index: {}]
  %s2 = inlined_call_operand.vmem [shape: f32[1,128], index: 2, kind: input, shape index: {}]
  %s3 = inlined_call_operand.hbm [shape: f32[32,128], index: 3, kind: output, shape index: {}]
  %s4 = sld [smem:[#allocation0]]
  $region53: #{tpu_custom_call.1} parent=0
    _
  %s6 = ssub.s32 1, %s4
  %s7 = scalar_select 0, %s6, %s4
  $region1: #{tpu_custom_call.1} parent=0
    #allocation2 [shape = 'u8[16384]{0}', space=vmem, size = 0x4000, scoped, tag = 'input window, operand 0']
    #allocation3 [shape = 's32[2]{0}', space=sflag, size = 0x8, scoped, tag = 'scoped memory for tpu_custom_call.1']
    #allocation4 [shape = 's32[2]{0}', space=sflag, size = 0x8, scoped, tag = 'scoped memory for tpu_custom_call.1']
    #allocation5 [shape = 'u8[32768]{0}', space=vmem, size = 0x8000, scoped, tag = 'input window, operand 1, single buffered']
    #allocation6 [shape = 's32[1]{0}', space=sflag, size = 0x4, scoped, tag = 'scoped memory for tpu_custom_call.1']
    #allocation7 [shape = 'u8[16384]{0}', space=vmem, size = 0x4000, scoped, tag = 'output window, operand 0']
    %8 = vsyncpa [#allocation3], 0
    %s9 = scalar_lea.sflag [#allocation3], 1
    %10 = vsyncpa %s9, 0
    %11 = vsyncpa [#allocation6], 0
    %12 = vsyncpa [#allocation4], 0
    %s13 = scalar_lea.sflag [#allocation4], 1
    %14 = vsyncpa %s13, 0
    loop: start=0, step=1, limit=4
    $region2: #{tpu_custom_call.1} parent=1 // loop_pre_header
      _
    $region3: #{tpu_custom_call.1} parent=1 // loop_header
      %s16 = sphi 0, %s20
      %p17 = scmp.ge.s32.totalorder %s16, 4
      %s26 = sphi 0, %s28
      %s29 = sphi 0, %s26
      %s30 = sphi 0, %s29
      %s46 = sphi 0, %s30
      %s50 = sphi 0, %s50
      %s52 = sphi 0, %s50
      %s53 = sphi 0, %s52
      %s67 = sphi 0, %s53
      %s71 = sphi 0, %s71
      %s73 = sphi 0, %s71
      %s74 = sphi 0, %s73
      %s88 = sphi 0, %s74
      %s94 = sphi 0, %s96
      %s97 = sphi 0, %s94
      %s98 = sphi 0, %s97
      %s114 = sphi 0, %s98
    $region4: #{tpu_custom_call.1} parent=1 // loop_header_branch
      %19 = sbr.rel (%p17) target = $region8
    $region5: #{tpu_custom_call.1} parent=1 // loop_body
      %s21 = ssub.s32 %s16, 1
      %s22 = ssub.s32 %s16, 2
      %s23 = sadd.s32 %s16, 1
      %s24 = ssub.s32 %s16, %s23
      %p25 = scmp.eq.s32.totalorder %s24, 0
      %s27 = sadd.s32 %s26, 1
      %s28 = scalar_select %p25, %s26, %s27
      %p31 = pneg %p25
      %p32 = scmp.eq.s32.totalorder %s16, 1
      %p33 = por %p31, %p32
      %p34 = scmp.ne.s32.totalorder %s26, %s29
      %p35 = scmp.eq.s32.totalorder %s16, 0
      %p36 = por %p34, %p35
      %p37 = scmp.ne.s32.totalorder %s26, %s29
      %p38 = scmp.eq.s32.totalorder %s21, 1
      %p39 = por %p37, %p38
      %p40 = scmp.ne.s32.totalorder %s29, %s30
      %p41 = scmp.eq.s32.totalorder %s21, 0
      %p42 = por %p40, %p41
      %p43 = scmp.ne.s32.totalorder %s29, %s30
      %p44 = scmp.eq.s32.totalorder %s22, 1
      %p45 = por %p43, %p44
      %p47 = scmp.ne.s32.totalorder %s30, %s46
      %p48 = scmp.eq.s32.totalorder %s22, 0
      %p49 = por %p47, %p48
      %s51 = sadd.s32 %s50, 1
      %p54 = scmp.eq.s32.totalorder %s16, 1
      %p55 = scmp.ne.s32.totalorder %s50, %s52
      %p56 = scmp.eq.s32.totalorder %s16, 0
      %p57 = por %p55, %p56
      %p58 = scmp.ne.s32.totalorder %s50, %s52
      %p59 = scmp.eq.s32.totalorder %s21, 1
      %p60 = por %p58, %p59
      %p61 = scmp.ne.s32.totalorder %s52, %s53
      %p62 = scmp.eq.s32.totalorder %s21, 0
      %p63 = por %p61, %p62
      %p64 = scmp.ne.s32.totalorder %s52, %s53
      %p65 = scmp.eq.s32.totalorder %s22, 1
      %p66 = por %p64, %p65
      %p68 = scmp.ne.s32.totalorder %s53, %s67
      %p69 = scmp.eq.s32.totalorder %s22, 0
      %p70 = por %p68, %p69
      %s72 = sadd.s32 %s71, 1
      %p75 = scmp.eq.s32.totalorder %s16, 1
      %p76 = scmp.ne.s32.totalorder %s71, %s73
      %p77 = scmp.eq.s32.totalorder %s16, 0
      %p78 = por %p76, %p77
      %p79 = scmp.ne.s32.totalorder %s71, %s73
      %p80 = scmp.eq.s32.totalorder %s21, 1
      %p81 = por %p79, %p80
      %p82 = scmp.ne.s32.totalorder %s73, %s74
      %p83 = scmp.eq.s32.totalorder %s21, 0
      %p84 = por %p82, %p83
      %p85 = scmp.ne.s32.totalorder %s73, %s74
      %p86 = scmp.eq.s32.totalorder %s22, 1
      %p87 = por %p85, %p86
      %p89 = scmp.ne.s32.totalorder %s74, %s88
      %p90 = scmp.eq.s32.totalorder %s22, 0
      %p91 = por %p89, %p90
      %s92 = ssub.s32 %s16, %s23
      %p93 = scmp.eq.s32.totalorder %s92, 0
      %s95 = sadd.s32 %s94, 1
      %s96 = scalar_select %p93, %s94, %s95
      %p99 = pneg %p93
      %p100 = scmp.eq.s32.totalorder %s16, 1
      %p101 = por %p99, %p100
      %p102 = scmp.ne.s32.totalorder %s94, %s97
      %p103 = scmp.eq.s32.totalorder %s16, 0
      %p104 = por %p102, %p103
      %p105 = scmp.ne.s32.totalorder %s94, %s97
      %p106 = scmp.eq.s32.totalorder %s21, 1
      %p107 = por %p105, %p106
      %p108 = scmp.ne.s32.totalorder %s97, %s98
      %p109 = scmp.eq.s32.totalorder %s21, 0
      %p110 = por %p108, %p109
      %p111 = scmp.ne.s32.totalorder %s97, %s98
      %p112 = scmp.eq.s32.totalorder %s22, 1
      %p113 = por %p111, %p112
      %p115 = scmp.ne.s32.totalorder %s98, %s114
      %p116 = scmp.eq.s32.totalorder %s22, 0
      %p117 = por %p115, %p116
      %p118 = scmp.le.s32.totalorder 1, %s16
      %p119 = scmp.lt.s32.totalorder %s16, 3
      %p120 = pnand %p118, %p119
      %p121 = pneg %p120
      // Predicated region
      $region9: #{tpu_custom_call.1} parent=5 // pred_check
        _
      $region10: #{tpu_custom_call.1} parent=5 // pred_check_branch
        %123 = sbr.rel (%p120) target = $region12
      $region11: #{tpu_custom_call.1} parent=5 // pred_region
        %s124 = ssub.s32 %s16, 1
        // Predicated region
        $region13: #{tpu_custom_call.1} parent=11 // pred_check
          %p125 = pneg %p63
        $region14: #{tpu_custom_call.1} parent=11 // pred_check_branch
          %127 = sbr.rel (%p125) target = $region16
        $region15: #{tpu_custom_call.1} parent=11 // pred_region
          %129 = vsyncadd [#allocation6], 0
          %s130 = sshll.u32 %s1, 4
          %s131 = int_to_ptr.hbm [resolvable:$true] %s130
          %s132 = sshll.u32 [#allocation5], 4
          %s133 = int_to_ptr.vmem [resolvable:$true] %s132
          %138 = dma.hbm_to_vmem [thread:$0]  %s131, 1024, %s133, [#allocation6], 128, 128, 8
        $region16: #{tpu_custom_call.1} parent=11 // pred_fallthru
          _
        // Predicated region
        $region17: #{tpu_custom_call.1} parent=11 // pred_check
          %p139 = pneg %p84
        $region18: #{tpu_custom_call.1} parent=11 // pred_check_branch
          %141 = sbr.rel (%p139) target = $region20
        $region19: #{tpu_custom_call.1} parent=11 // pred_region
          _
        $region20: #{tpu_custom_call.1} parent=11 // pred_fallthru
          _
      $region12: #{tpu_custom_call.1} parent=5 // pred_fallthru
        _
      %p142 = scmp.lt.s32.totalorder %s16, 2
      // Predicated region
      $region21: #{tpu_custom_call.1} parent=5 // pred_check
        %p143 = pneg %p142
      $region22: #{tpu_custom_call.1} parent=5 // pred_check_branch
        %145 = sbr.rel (%p143) target = $region24
      $region23: #{tpu_custom_call.1} parent=5 // pred_region
        // Predicated region
        $region25: #{tpu_custom_call.1} parent=23 // pred_check
          %p146 = pneg %p36
        $region26: #{tpu_custom_call.1} parent=23 // pred_check_branch
          %148 = sbr.rel (%p146) target = $region28
        $region27: #{tpu_custom_call.1} parent=23 // pred_region
          %s149 = sand.u32 %s26, 1
          %s150 = scalar_lea.sflag [#allocation3], %s149
          %s151 = sand.u32 %s26, 1
          %s152 = smul.addr %s151, 16
          %s153 = scalar_lea.vmem [#allocation2], %s152
          %s154 = smul.u32 2, %s16
          %156 = vsyncadd %s150, 0
          %s157 = smul.addr %s154, 8
          %s158 = scalar_lea.hbm %s0, %s157
          %s159 = sshll.u32 %s158, 4
          %s160 = int_to_ptr.hbm [resolvable:$true] %s159
          %s161 = sshll.u32 %s153, 4
          %s162 = int_to_ptr.vmem [resolvable:$true] %s161
          %167 = dma.hbm_to_vmem [thread:$0]  %s160, 256, %s162, %s150, 128, 128, 8
        $region28: #{tpu_custom_call.1} parent=23 // pred_fallthru
          _
      $region24: #{tpu_custom_call.1} parent=5 // pred_fallthru
        _
      %p168 = scmp.le.s32.totalorder 1, %s16
      %p169 = scmp.lt.s32.totalorder %s16, 3
      %p170 = pnand %p168, %p169
      %p171 = pneg %p170
      // Predicated region
      $region29: #{tpu_custom_call.1} parent=5 // pred_check
        _
      $region30: #{tpu_custom_call.1} parent=5 // pred_check_branch
        %173 = sbr.rel (%p170) target = $region32
      $region31: #{tpu_custom_call.1} parent=5 // pred_region
        %s174 = ssub.s32 %s16, 1
        %s175 = sand.u32 %s29, 1
        %s176 = scalar_lea.sflag [#allocation3], %s175
        %s177 = sand.u32 %s29, 1
        %s178 = smul.addr %s177, 16
        %s179 = scalar_lea.vmem [#allocation2], %s178
        // Predicated region
        $region33: #{tpu_custom_call.1} parent=31 // pred_check
          %p180 = pneg %p42
        $region34: #{tpu_custom_call.1} parent=31 // pred_check_branch
          %182 = sbr.rel (%p180) target = $region36
        $region35: #{tpu_custom_call.1} parent=31 // pred_region
          %184 = dma.done %s176, 256
        $region36: #{tpu_custom_call.1} parent=31 // pred_fallthru
          _
        // Predicated region
        $region37: #{tpu_custom_call.1} parent=31 // pred_check
          %p185 = pneg %p63
        $region38: #{tpu_custom_call.1} parent=31 // pred_check_branch
          %187 = sbr.rel (%p185) target = $region40
        $region39: #{tpu_custom_call.1} parent=31 // pred_region
          %189 = dma.done [#allocation6], 1024
        $region40: #{tpu_custom_call.1} parent=31 // pred_fallthru
          _
        %s190 = sand.u32 %s29, 1
        %s191 = scalar_lea.sflag [#allocation3], %s190
        %s192 = sand.u32 %s29, 1
        %s193 = smul.addr %s192, 16
        %s194 = scalar_lea.vmem [#allocation2], %s193
        %p195 = pneg %p42
        %p196 = pneg %p39
        %p197 = pneg %p63
        %p198 = pneg %p60
        %p199 = pneg %p84
        %p200 = pneg %p81
        %p201 = pneg %p110
        %p202 = pneg %p107
        %s203 = sand.u32 %s97, 1
        %s204 = scalar_lea.sflag [#allocation4], %s203
        %s205 = sand.u32 %s97, 1
        %s206 = smul.addr %s205, 16
        %s207 = scalar_lea.vmem [#allocation7], %s206
        %s208 = smul.u32 2, %s21
        %s209 = smul.u32 2, %s21
        %v210 = vld [vmem:[%s179] sm:$0xff]
        %v211 = vld [vmem:[%s179 + $0x8] sm:$0xff]
        %v212 = vld [vmem:[#allocation5] sm:$0xff]
        %v213 = vld [vmem:[#allocation5 + $0x8] sm:$0xff]
        %v214 = vld [vmem:[#allocation5 + $0x10] sm:$0xff]
        %v215 = vld [vmem:[#allocation5 + $0x18] sm:$0xff]
        %v216 = vld [vmem:[#allocation5 + $0x20] sm:$0xff]
        %v217 = vld [vmem:[#allocation5 + $0x28] sm:$0xff]
        %v218 = vld [vmem:[#allocation5 + $0x30] sm:$0xff]
        %v219 = vld [vmem:[#allocation5 + $0x38] sm:$0xff]
        %v220 = vld [vmem:[%s2] sm:$0x1]
        %v222 = vperm.slane %v220, 0
        %vm224 = vcmask 523264
        %v226 = vsel %vm224, %v210, 0
        %v229 = vsel %vm224, %v211, 0
        %231 = vmatpush.msra.mxu0 0.0
        %232 = vmatpush.msra.mxu0 0.0
        %233 = vmatpush.msra.mxu0 0.0
        %234 = vmatpush.msra.mxu0 0.0
        %235 = vmatpush.msra.mxu0 0.0
        %236 = vmatpush.msra.mxu0 0.0
        %237 = vmatpush.msra.mxu0 0.0
        %238 = vmatpush.msra.mxu0 0.0
        %239 = vmatpush.msra.mxu0 %v219
        %240 = vmatpush.msra.mxu0 %v218
        %241 = vmatpush.msra.mxu0 %v217
        %242 = vmatpush.msra.mxu0 %v216
        %243 = vmatpush.msra.mxu0 %v215
        %244 = vmatpush.msra.mxu0 %v214
        %245 = vmatpush.msra.mxu0 %v213
        %246 = vmatpush.msra.mxu0 %v212
        %247 = vmatmul.f32.gmra.mxu0 %v226
        %v248 = vpop.f32.mrf.mxu0
        %v249 = vadd.f32 %v222, %v248
        %250 = vmatmul.f32.gmra.mxu0 %v229
        %v251 = vpop.f32.mrf.mxu0
        %v252 = vadd.f32 %v222, %v251
        %253 = vdwg.mxu0
        %254 = vst [vmem:[%s207] sm:$0xff] %v249
        %255 = vst [vmem:[%s207 + $0x8] sm:$0xff] %v252
        %s256 = sand.u32 %s97, 1
        %s257 = scalar_lea.sflag [#allocation4], %s256
        %s258 = sand.u32 %s97, 1
        %s259 = smul.addr %s258, 16
        %s260 = scalar_lea.vmem [#allocation7], %s259
        // Predicated region
        $region41: #{tpu_custom_call.1} parent=31 // pred_check
          %p261 = pneg %p107
        $region42: #{tpu_custom_call.1} parent=31 // pred_check_branch
          %263 = sbr.rel (%p261) target = $region44
        $region43: #{tpu_custom_call.1} parent=31 // pred_region
          %s264 = smul.u32 2, %s21
          %266 = vsyncadd %s257, 0
          %s267 = smul.addr %s264, 8
          %s268 = scalar_lea.hbm %s3, %s267
          %s269 = sshll.u32 %s260, 4
          %s270 = int_to_ptr.vmem [resolvable:$true] %s269
          %s271 = sshll.u32 %s268, 4
          %s272 = int_to_ptr.hbm [resolvable:$true] %s271
          %277 = dma.vmem_to_hbm [thread:$0]  %s270, 256, %s272, %s257, 128, 128, 8
        $region44: #{tpu_custom_call.1} parent=31 // pred_fallthru
          _
      $region32: #{tpu_custom_call.1} parent=5 // pred_fallthru
        _
      %p278 = scmp.le.s32.totalorder 2, %s16
      // Predicated region
      $region45: #{tpu_custom_call.1} parent=5 // pred_check
        %p279 = pneg %p278
      $region46: #{tpu_custom_call.1} parent=5 // pred_check_branch
        %281 = sbr.rel (%p279) target = $region48
      $region47: #{tpu_custom_call.1} parent=5 // pred_region
        %s282 = ssub.s32 %s16, 2
        // Predicated region
        $region49: #{tpu_custom_call.1} parent=47 // pred_check
          %p283 = pneg %p113
        $region50: #{tpu_custom_call.1} parent=47 // pred_check_branch
          %285 = sbr.rel (%p283) target = $region52
        $region51: #{tpu_custom_call.1} parent=47 // pred_region
          %s286 = sand.u32 %s98, 1
          %s287 = scalar_lea.sflag [#allocation4], %s286
          %s288 = sand.u32 %s98, 1
          %s289 = smul.addr %s288, 16
          %s290 = scalar_lea.vmem [#allocation7], %s289
          %292 = dma.done %s287, 256
        $region52: #{tpu_custom_call.1} parent=47 // pred_fallthru
          _
      $region48: #{tpu_custom_call.1} parent=5 // pred_fallthru
        _
    $region6: #{tpu_custom_call.1} parent=1 // loop_footer
      %s20 = sadd.s32 1, %s16
    $region7: #{tpu_custom_call.1} parent=1 // loop_footer_branch
      %15 = sbr.rel target = $region3
    $region8: #{tpu_custom_call.1} parent=1 // loop_exit
      _
    %293 = vsyncpa [#allocation3], 1
    %s294 = scalar_lea.sflag [#allocation3], 1
    %295 = vsyncpa %s294, 1
    %296 = vsyncpa [#allocation6], 1
    %297 = vsyncpa [#allocation4], 1
    %s298 = scalar_lea.sflag [#allocation4], 1
    %299 = vsyncpa %s298, 1

</llo_original>
